<compile_context>
chip_gen: v7x
topology: tpu7x:2x2x1
jax: 0.10.0
libtpu: 0.0.40
codegen_flags: <defaults>
</compile_context>

<pallas_src>
import math

import jax
import jax.numpy as jnp
from jax import lax
from jax.experimental import pallas as pl
from jax.experimental.pallas import tpu as pltpu

NEG_SLOPE = 0.2
LANE = 128


def _gcn_agg_kernel(feat_ref, w_ref, adj_ref, h_ref):
    """One dst-row strip of h_agg = A @ (feat @ W^T)."""
    # Linear (MXU, bf16 x bf16 -> f32 acc).  Tiny; recomputed per strip.
    h_lin = jnp.dot(feat_ref[...], w_ref[...],
                    preferred_element_type=jnp.float32)               # [N, F_pad] f32
    # Message passing copy_u+sum == A[dst strip, :] @ h_lin (MXU, bf16 inputs, f32 acc).
    h_ref[...] = jnp.dot(adj_ref[...], h_lin.astype(jnp.bfloat16),
                         preferred_element_type=jnp.float32)          # [TM, F_pad] f32


def _gcn_edge_kernel(h_src_ref, h_dst_ref, adj_ref, esoft_ref):
    """One dst-row strip of e_soft = edge_softmax(leaky_relu(<h_src, tanh(h_dst)>))."""
    # scores[d, s] = sum_k h_src[s, k] * tanh(h_dst[d, k])
    # contract the last dims of both operands -> no explicit transpose of h_src.
    scores = lax.dot_general(
        jnp.tanh(h_dst_ref[...]).astype(jnp.bfloat16),
        h_src_ref[...].astype(jnp.bfloat16),
        (((1,), (1,)), ((), ())),
        preferred_element_type=jnp.float32)                           # [TM, N] f32

    # LeakyReLU(0.2)  (max form valid since 0 < slope < 1).
    e = jnp.maximum(scores, NEG_SLOPE * scores)

    # Edge softmax over incoming edges (per dst row), masked by the 0/1 adjacency.
    adj = adj_ref[...].astype(jnp.float32)
    e_masked = jnp.where(adj > 0.0, e, jnp.float32(-1e30))            # masked row-max for stability
    m = jnp.max(e_masked, axis=1, keepdims=True)
    p = adj * jnp.exp(e_masked - m)                                   # 0 on non-edges / empty rows
    denom = jnp.sum(p, axis=1, keepdims=True)
    inv = pl.reciprocal(jnp.maximum(denom, jnp.float32(1e-30)), approx=True)   # EUP, not VALU
    esoft_ref[...] = p * inv


def gcn_layer_forward(feat, w_t, adj, *, tile_m=None):
    """feat: [N, F_in] f32, w_t: [F_in, F_out] (= W.T of nn.Linear), adj: [N, N] (dst, src) 0/1.

    Returns (h_agg [N, F_out] f32, [e_soft [N, N] f32])."""
    N, F_in = feat.shape
    F_out = w_t.shape[1]
    F_pad = pl.cdiv(F_out, LANE) * LANE              # lane-dense padded feature dim

    if tile_m is None:
        tile_m = min(N, 256)                         # TODO(synk): sweep per-generation (bigger on v6e).
    assert N % tile_m == 0 and tile_m % 8 == 0, (N, tile_m)
    grid = (N // tile_m,)
    n_steps = N // tile_m

    # bf16 inputs: halve HBM->VMEM DMA bytes and run the MXU at full rate.  adj is 0/1 -> exact.
    feat_b = feat.astype(jnp.bfloat16)
    adj_b = adj.astype(jnp.bfloat16)
    w_pad = jnp.zeros((F_in, F_pad), jnp.bfloat16).at[:, :F_out].set(w_t.astype(jnp.bfloat16))

    parallel = pltpu.CompilerParams(dimension_semantics=("parallel",))

    # ---- pass 1: h_agg = A @ (feat @ W^T), dst-row tiled ----
    h_pad = pl.pallas_call(
        _gcn_agg_kernel,
        out_shape=jax.ShapeDtypeStruct((N, F_pad), jnp.float32),
        grid=grid,
        in_specs=[pl.BlockSpec((N, F_in), lambda i: (0, 0)),        # feat (full, reused)
                  pl.BlockSpec((F_in, F_pad), lambda i: (0, 0)),    # W^T padded (full, reused)
                  pl.BlockSpec((tile_m, N), lambda i: (i, 0))],     # adj dst strip
        out_specs=pl.BlockSpec((tile_m, F_pad), lambda i: (i, 0)),  # lane-dense h strip
        compiler_params=parallel,
        cost_estimate=pl.CostEstimate(
            flops=2 * N * N * F_pad + 2 * N * F_in * F_pad * n_steps,
            transcendentals=0,
            bytes_accessed=2 * (N * F_in + F_in * F_pad + N * N) + 4 * N * F_pad),
    )(feat_b, w_pad, adj_b)

    # ---- pass 2: edge scores + edge softmax, dst-row tiled ----
    e_soft = pl.pallas_call(
        _gcn_edge_kernel,
        out_shape=jax.ShapeDtypeStruct((N, N), jnp.float32),
        grid=grid,
        in_specs=[pl.BlockSpec((N, F_pad), lambda i: (0, 0)),       # h_agg src side (full, reused)
                  pl.BlockSpec((tile_m, F_pad), lambda i: (i, 0)),  # h_agg dst strip
                  pl.BlockSpec((tile_m, N), lambda i: (i, 0))],     # adj dst strip
        out_specs=pl.BlockSpec((tile_m, N), lambda i: (i, 0)),
        compiler_params=parallel,
        cost_estimate=pl.CostEstimate(
            flops=2 * N * N * F_pad + 8 * N * N,
            transcendentals=N * N + N * F_pad * n_steps + N,
            bytes_accessed=4 * N * F_pad * (1 + n_steps) + 2 * N * N + 4 * N * N),
    )(h_pad, h_pad, adj_b)

    return h_pad[:, :F_out], [e_soft]


# ---------------- references (same bf16 quantization path, f32 accumulation) ----------------

def _agg_reference(feat_b, w_b, adj_b):
    h_lin = jnp.dot(feat_b, w_b, preferred_element_type=jnp.float32)
    return jnp.dot(adj_b, h_lin.astype(jnp.bfloat16), preferred_element_type=jnp.float32)


def _edge_reference(h_agg, adj):
    scores = lax.dot_general(jnp.tanh(h_agg).astype(jnp.bfloat16),
                             h_agg.astype(jnp.bfloat16),
                             (((1,), (1,)), ((), ())),
                             preferred_element_type=jnp.float32)
    e = jnp.maximum(scores, NEG_SLOPE * scores)
    mask = adj > 0
    e_masked = jnp.where(mask, e, -1e30)
    m = jnp.max(e_masked, axis=1, keepdims=True)
    p = jnp.where(mask, jnp.exp(e_masked - m), 0.0)
    denom = jnp.sum(p, axis=1, keepdims=True)
    return jnp.where(denom > 0, p / jnp.maximum(denom, 1e-30), 0.0)


if __name__ == "__main__":
    key = jax.random.PRNGKey(0)
    N, F_in, F_out = 128, 32, 16

    k_feat, k_w, k_adj = jax.random.split(key, 3)

    # Node features.
    feat = jax.random.normal(k_feat, (N, F_in), dtype=jnp.float32)

    # nn.Linear(in_feats, out_feats, bias=False) weight: [F_out, F_in],
    # Xavier-normal with gain = calculate_gain('leaky_relu', 0.2).
    gain = math.sqrt(2.0 / (1.0 + NEG_SLOPE ** 2))
    std = gain * math.sqrt(2.0 / (F_in + F_out))
    W = std * jax.random.normal(k_w, (F_out, F_in), dtype=jnp.float32)
    w_t = W.T  # [F_in, F_out]

    # Random directed graph as dense adjacency A[dst, src], with self-loops.
    adj = (jax.random.uniform(k_adj, (N, N)) < 0.25).astype(jnp.float32)
    adj = jnp.maximum(adj, jnp.eye(N, dtype=jnp.float32))

    h, elist = gcn_layer_forward(feat, w_t, adj, tile_m=64)   # grid of 2 dst-row strips
    jax.block_until_ready((h, elist[0]))

    # Stage 1: node aggregation checked end-to-end against an independent (same-precision) ref.
    h_ref = _agg_reference(feat.astype(jnp.bfloat16), w_t.astype(jnp.bfloat16),
                           adj.astype(jnp.bfloat16))
    assert jnp.allclose(h, h_ref, rtol=2e-3, atol=2e-3)

    # Stage 2: edge-score + edge-softmax checked on the kernel's own h (same quantization path;
    # tolerance covers the approximate reciprocal).
    esoft_ref = _edge_reference(h, adj)
    assert jnp.allclose(elist[0], esoft_ref, rtol=2e-2, atol=2e-2)

    print("KERNEL_OK")
</pallas_src>

<mosaic_0001>
module attributes {stable_mosaic.version = 11 : i64} {
  func.func @_gcn_agg_kernel(%arg0: i32, %arg1: memref<128x32xbf16, #tpu.memory_space<vmem>>, %arg2: memref<32x128xbf16, #tpu.memory_space<vmem>>, %arg3: memref<64x128xbf16, #tpu.memory_space<vmem>>, %arg4: memref<64x128xf32, #tpu.memory_space<vmem>>) attributes {dimension_semantics = [#tpu.dimension_semantics<parallel>], iteration_bounds = array<i64: 2>, scalar_prefetch = 0 : i64, scratch_operands = 0 : i64, tpu.core_type = #tpu.core_type<tc>, window_params = [{pipeline_mode = #tpu.pipeline_mode<synchronous>, transform_indices = @transform_0, window_bounds = array<i64: 128, 32>}, {pipeline_mode = #tpu.pipeline_mode<synchronous>, transform_indices = @transform_1, window_bounds = array<i64: 32, 128>}, {transform_indices = @transform_2, window_bounds = array<i64: 64, 128>}, {transform_indices = @transform_3, window_bounds = array<i64: 64, 128>}]} {
    %c0 = arith.constant 0 : index
    %c0_0 = arith.constant 0 : index
    %0 = vector.load %arg1[%c0, %c0_0] : memref<128x32xbf16, #tpu.memory_space<vmem>>, vector<128x32xbf16>
    %c0_1 = arith.constant 0 : index
    %c0_2 = arith.constant 0 : index
    %1 = vector.load %arg2[%c0_1, %c0_2] : memref<32x128xbf16, #tpu.memory_space<vmem>>, vector<32x128xbf16>
    %cst = arith.constant dense<0.000000e+00> : vector<128x128xf32>
    %2 = tpu.matmul %0, %1, %cst {dimension_numbers = #tpu.dot_dimension_numbers<[1], [0], [0], [1], [0, 0, 1, 1], [], []>} : vector<128x32xbf16>, vector<32x128xbf16>, vector<128x128xf32> -> vector<128x128xf32>
    %c0_3 = arith.constant 0 : index
    %c0_4 = arith.constant 0 : index
    %3 = vector.load %arg3[%c0_3, %c0_4] : memref<64x128xbf16, #tpu.memory_space<vmem>>, vector<64x128xbf16>
    %4 = arith.truncf %2 : vector<128x128xf32> to vector<128x128xbf16>
    %cst_5 = arith.constant dense<0.000000e+00> : vector<64x128xf32>
    %5 = tpu.matmul %3, %4, %cst_5 {dimension_numbers = #tpu.dot_dimension_numbers<[1], [0], [0], [1], [0, 0, 1, 1], [], []>} : vector<64x128xbf16>, vector<128x128xbf16>, vector<64x128xf32> -> vector<64x128xf32>
    %c0_6 = arith.constant 0 : index
    %c0_7 = arith.constant 0 : index
    %6 = vector.load %arg4[%c0_6, %c0_7] : memref<64x128xf32, #tpu.memory_space<vmem>>, vector<64x128xf32>
    tpu.vector_store %arg4[%c0_6, %c0_7], %5 {strides = array<i32>} : memref<64x128xf32, #tpu.memory_space<vmem>>, vector<64x128xf32>,
    return
  }
  func.func @transform_0(%arg0: i32) -> (i32, i32) {
    %c0_i32 = arith.constant 0 : i32
    %c0_i32_0 = arith.constant 0 : i32
    %c0_i32_1 = arith.constant 0 : i32
    return %c0_i32, %c0_i32_0 : i32, i32
  }
  func.func @transform_1(%arg0: i32) -> (i32, i32) {
    %c0_i32 = arith.constant 0 : i32
    %c0_i32_0 = arith.constant 0 : i32
    %c0_i32_1 = arith.constant 0 : i32
    return %c0_i32, %c0_i32_0 : i32, i32
  }
  func.func @transform_2(%arg0: i32) -> (i32, i32) {
    %c0_i32 = arith.constant 0 : i32
    %c0_i32_0 = arith.constant 0 : i32
    return %arg0, %c0_i32 : i32, i32
  }
  func.func @transform_3(%arg0: i32) -> (i32, i32) {
    %c0_i32 = arith.constant 0 : i32
    %c0_i32_0 = arith.constant 0 : i32
    return %arg0, %c0_i32 : i32, i32
  }
}

</mosaic_0001>

<llo_original>
// kernel: tpu_custom_call.1
$region0: #{tpu_custom_call.1}
  #allocation0 [shape = 'u32[]', space=smem, size = 0x4, offset = 0x4, fixed_abs, tag = 'smem constant byte address 0x4 - core index']
  #allocation1 [shape = 'u32[144,128]{1,0:T(1,128)}', space=vmem, size = 0x12000, scoped, tag = 'internal scratch']
  %s0 = inlined_call_operand.vmem [shape: bf16[128,32], index: 0, kind: input, shape index: {}]
  %s1 = inlined_call_operand.vmem [shape: bf16[32,128], index: 1, kind: input, shape index: {}]
  %s2 = inlined_call_operand.vmem [shape: bf16[128,128], index: 2, kind: input, shape index: {}]
  %s3 = inlined_call_operand.hbm [shape: f32[128,128], index: 3, kind: output, shape index: {}]
  %s4 = sld [smem:[#allocation0]]
  $region45: #{tpu_custom_call.1} parent=0
    _
  %s6 = ssub.s32 1, %s4
  %s7 = scalar_select 0, %s6, %s4
  $region1: #{tpu_custom_call.1} parent=0
    #allocation2 [shape = 'u8[65536]{0}', space=vmem, size = 0x10000, scoped, tag = 'output window, operand 0']
    #allocation3 [shape = 's32[2]{0}', space=sflag, size = 0x8, scoped, tag = 'scoped memory for tpu_custom_call.1']
    %8 = vsyncpa [#allocation3], 0
    %s9 = scalar_lea.sflag [#allocation3], 1
    %10 = vsyncpa %s9, 0
    loop: start=0, step=1, limit=4
    $region2: #{tpu_custom_call.1} parent=1 // loop_pre_header
      _
    $region3: #{tpu_custom_call.1} parent=1 // loop_header
      %s12 = sphi 0, %s16
      %p13 = scmp.ge.s32.totalorder %s12, 4
      %s20 = sphi 0, %s20
      %s22 = sphi 0, %s20
      %s23 = sphi 0, %s22
      %s37 = sphi 0, %s23
      %s41 = sphi 0, %s41
      %s43 = sphi 0, %s41
      %s44 = sphi 0, %s43
      %s58 = sphi 0, %s44
      %s64 = sphi 0, %s66
      %s67 = sphi 0, %s64
      %s68 = sphi 0, %s67
      %s84 = sphi 0, %s68
      %s90 = sphi 0, %s92
      %s93 = sphi 0, %s90
      %s94 = sphi 0, %s93
      %s110 = sphi 0, %s94
    $region4: #{tpu_custom_call.1} parent=1 // loop_header_branch
      %15 = sbr.rel (%p13) target = $region8
    $region5: #{tpu_custom_call.1} parent=1 // loop_body
      %s17 = ssub.s32 %s12, 1
      %s18 = ssub.s32 %s12, 2
      %s19 = sadd.s32 %s12, 1
      %s21 = sadd.s32 %s20, 1
      %p24 = scmp.eq.s32.totalorder %s12, 1
      %p25 = scmp.ne.s32.totalorder %s20, %s22
      %p26 = scmp.eq.s32.totalorder %s12, 0
      %p27 = por %p25, %p26
      %p28 = scmp.ne.s32.totalorder %s20, %s22
      %p29 = scmp.eq.s32.totalorder %s17, 1
      %p30 = por %p28, %p29
      %p31 = scmp.ne.s32.totalorder %s22, %s23
      %p32 = scmp.eq.s32.totalorder %s17, 0
      %p33 = por %p31, %p32
      %p34 = scmp.ne.s32.totalorder %s22, %s23
      %p35 = scmp.eq.s32.totalorder %s18, 1
      %p36 = por %p34, %p35
      %p38 = scmp.ne.s32.totalorder %s23, %s37
      %p39 = scmp.eq.s32.totalorder %s18, 0
      %p40 = por %p38, %p39
      %s42 = sadd.s32 %s41, 1
      %p45 = scmp.eq.s32.totalorder %s12, 1
      %p46 = scmp.ne.s32.totalorder %s41, %s43
      %p47 = scmp.eq.s32.totalorder %s12, 0
      %p48 = por %p46, %p47
      %p49 = scmp.ne.s32.totalorder %s41, %s43
      %p50 = scmp.eq.s32.totalorder %s17, 1
      %p51 = por %p49, %p50
      %p52 = scmp.ne.s32.totalorder %s43, %s44
      %p53 = scmp.eq.s32.totalorder %s17, 0
      %p54 = por %p52, %p53
      %p55 = scmp.ne.s32.totalorder %s43, %s44
      %p56 = scmp.eq.s32.totalorder %s18, 1
      %p57 = por %p55, %p56
      %p59 = scmp.ne.s32.totalorder %s44, %s58
      %p60 = scmp.eq.s32.totalorder %s18, 0
      %p61 = por %p59, %p60
      %s62 = ssub.s32 %s12, %s19
      %p63 = scmp.eq.s32.totalorder %s62, 0
      %s65 = sadd.s32 %s64, 1
      %s66 = scalar_select %p63, %s64, %s65
      %p69 = pneg %p63
      %p70 = scmp.eq.s32.totalorder %s12, 1
      %p71 = por %p69, %p70
      %p72 = scmp.ne.s32.totalorder %s64, %s67
      %p73 = scmp.eq.s32.totalorder %s12, 0
      %p74 = por %p72, %p73
      %p75 = scmp.ne.s32.totalorder %s64, %s67
      %p76 = scmp.eq.s32.totalorder %s17, 1
      %p77 = por %p75, %p76
      %p78 = scmp.ne.s32.totalorder %s67, %s68
      %p79 = scmp.eq.s32.totalorder %s17, 0
      %p80 = por %p78, %p79
      %p81 = scmp.ne.s32.totalorder %s67, %s68
      %p82 = scmp.eq.s32.totalorder %s18, 1
      %p83 = por %p81, %p82
      %p85 = scmp.ne.s32.totalorder %s68, %s84
      %p86 = scmp.eq.s32.totalorder %s18, 0
      %p87 = por %p85, %p86
      %s88 = ssub.s32 %s12, %s19
      %p89 = scmp.eq.s32.totalorder %s88, 0
      %s91 = sadd.s32 %s90, 1
      %s92 = scalar_select %p89, %s90, %s91
      %p95 = pneg %p89
      %p96 = scmp.eq.s32.totalorder %s12, 1
      %p97 = por %p95, %p96
      %p98 = scmp.ne.s32.totalorder %s90, %s93
      %p99 = scmp.eq.s32.totalorder %s12, 0
      %p100 = por %p98, %p99
      %p101 = scmp.ne.s32.totalorder %s90, %s93
      %p102 = scmp.eq.s32.totalorder %s17, 1
      %p103 = por %p101, %p102
      %p104 = scmp.ne.s32.totalorder %s93, %s94
      %p105 = scmp.eq.s32.totalorder %s17, 0
      %p106 = por %p104, %p105
      %p107 = scmp.ne.s32.totalorder %s93, %s94
      %p108 = scmp.eq.s32.totalorder %s18, 1
      %p109 = por %p107, %p108
      %p111 = scmp.ne.s32.totalorder %s94, %s110
      %p112 = scmp.eq.s32.totalorder %s18, 0
      %p113 = por %p111, %p112
      %p114 = scmp.le.s32.totalorder 1, %s12
      %p115 = scmp.lt.s32.totalorder %s12, 3
      %p116 = pnand %p114, %p115
      %p117 = pneg %p116
      // Predicated region
      $region9: #{tpu_custom_call.1} parent=5 // pred_check
        _
      $region10: #{tpu_custom_call.1} parent=5 // pred_check_branch
        %119 = sbr.rel (%p116) target = $region12
      $region11: #{tpu_custom_call.1} parent=5 // pred_region
        %s120 = ssub.s32 %s12, 1
        // Predicated region
        $region13: #{tpu_custom_call.1} parent=11 // pred_check
          %p121 = pneg %p33
        $region14: #{tpu_custom_call.1} parent=11 // pred_check_branch
          %123 = sbr.rel (%p121) target = $region16
        $region15: #{tpu_custom_call.1} parent=11 // pred_region
          _
        $region16: #{tpu_custom_call.1} parent=11 // pred_fallthru
          _
        // Predicated region
        $region17: #{tpu_custom_call.1} parent=11 // pred_check
          %p124 = pneg %p54
        $region18: #{tpu_custom_call.1} parent=11 // pred_check_branch
          %126 = sbr.rel (%p124) target = $region20
        $region19: #{tpu_custom_call.1} parent=11 // pred_region
          _
        $region20: #{tpu_custom_call.1} parent=11 // pred_fallthru
          _
      $region12: #{tpu_custom_call.1} parent=5 // pred_fallthru
        _
      %p127 = scmp.lt.s32.totalorder %s12, 2
      // Predicated region
      $region21: #{tpu_custom_call.1} parent=5 // pred_check
        %p128 = pneg %p127
      $region22: #{tpu_custom_call.1} parent=5 // pred_check_branch
        %130 = sbr.rel (%p128) target = $region24
      $region23: #{tpu_custom_call.1} parent=5 // pred_region
        // Predicated region
        $region25: #{tpu_custom_call.1} parent=23 // pred_check
          %p131 = pneg %p74
        $region26: #{tpu_custom_call.1} parent=23 // pred_check_branch
          %133 = sbr.rel (%p131) target = $region28
        $region27: #{tpu_custom_call.1} parent=23 // pred_region
          %s134 = smul.u32 8, %s12
          %p135 = scmp.lt.s32.totalorder %s134, 15
          %s136 = scalar_select %p135, %s134, 15
          %s137 = smul.addr %s136, 4
          %s138 = scalar_lea.vmem %s2, %s137
          %s139 = smul.u32 8, %s12
        $region28: #{tpu_custom_call.1} parent=23 // pred_fallthru
          _
      $region24: #{tpu_custom_call.1} parent=5 // pred_fallthru
        _
      %p140 = scmp.le.s32.totalorder 1, %s12
      %p141 = scmp.lt.s32.totalorder %s12, 3
      %p142 = pnand %p140, %p141
      %p143 = pneg %p142
      // Predicated region
      $region29: #{tpu_custom_call.1} parent=5 // pred_check
        _
      $region30: #{tpu_custom_call.1} parent=5 // pred_check_branch
        %145 = sbr.rel (%p142) target = $region32
      $region31: #{tpu_custom_call.1} parent=5 // pred_region
        %s146 = ssub.s32 %s12, 1
        %p147 = pneg %p33
        %p148 = pneg %p30
        %p149 = pneg %p54
        %p150 = pneg %p51
        %s151 = smul.u32 8, %s17
        %p152 = scmp.lt.s32.totalorder %s151, 15
        %s153 = scalar_select %p152, %s151, 15
        %s154 = smul.addr %s153, 4
        %s155 = scalar_lea.vmem %s2, %s154
        %p156 = pneg %p80
        %p157 = pneg %p77
        %p158 = pneg %p106
        %p159 = pneg %p103
        %s160 = sand.u32 %s93, 1
        %s161 = scalar_lea.sflag [#allocation3], %s160
        %s162 = sand.u32 %s93, 1
        %s163 = smul.addr %s162, 64
        %s164 = scalar_lea.vmem [#allocation2], %s163
        %s165 = smul.u32 8, %s17
        %p166 = scmp.lt.s32.totalorder %s165, 15
        %s167 = scalar_select %p166, %s165, 15
        %s168 = smul.addr %s167, 4
        %s169 = scalar_lea.vmem %s2, %s168
        %s170 = smul.u32 8, %s17
        %s171 = smul.u32 8, %s17
        %v173 = vld [vmem:[%s0] sm:$0xf]
        %v174 = vld [vmem:[%s0 + $0x4] sm:$0xf]
        %v175 = vld [vmem:[%s0 + $0x8] sm:$0xf]
        %v176 = vld [vmem:[%s0 + $0xc] sm:$0xf]
        %v177 = vld [vmem:[%s0 + $0x10] sm:$0xf]
        %v178 = vld [vmem:[%s0 + $0x14] sm:$0xf]
        %v179 = vld [vmem:[%s0 + $0x18] sm:$0xf]
        %v180 = vld [vmem:[%s0 + $0x1c] sm:$0xf]
        %v181 = vld [vmem:[%s0 + $0x20] sm:$0xf]
        %v182 = vld [vmem:[%s0 + $0x24] sm:$0xf]
        %v183 = vld [vmem:[%s0 + $0x28] sm:$0xf]
        %v184 = vld [vmem:[%s0 + $0x2c] sm:$0xf]
        %v185 = vld [vmem:[%s0 + $0x30] sm:$0xf]
        %v186 = vld [vmem:[%s0 + $0x34] sm:$0xf]
        %v187 = vld [vmem:[%s0 + $0x38] sm:$0xf]
        %v188 = vld [vmem:[%s0 + $0x3c] sm:$0xf]
        %v189 = vld [vmem:[%s1] sm:$0xf]
        %v190 = vld [vmem:[%s1 + $0x4] sm:$0xf]
        %v191 = vld [vmem:[%s1 + $0x8] sm:$0xf]
        %v192 = vld [vmem:[%s1 + $0xc] sm:$0xf]
        %v209 = vunpack.c.l.b16 %v173
        %v210 = vunpack.c.l.b16 %v174
        %v211 = vunpack.c.l.b16 %v175
        %v212 = vunpack.c.l.b16 %v176
        %v213 = vunpack.c.l.b16 %v177
        %v214 = vunpack.c.l.b16 %v178
        %v215 = vunpack.c.l.b16 %v179
        %v216 = vunpack.c.l.b16 %v180
        %v217 = vunpack.c.l.b16 %v181
        %v218 = vunpack.c.l.b16 %v182
        %v219 = vunpack.c.l.b16 %v183
        %v220 = vunpack.c.l.b16 %v184
        %v221 = vunpack.c.l.b16 %v185
        %v222 = vunpack.c.l.b16 %v186
        %v223 = vunpack.c.l.b16 %v187
        %v224 = vunpack.c.l.b16 %v188
        %v225 = vpack.c.b16 %v210, %v209
        %v226 = vpack.c.b16 %v212, %v211
        %v227 = vpack.c.b16 %v214, %v213
        %v228 = vpack.c.b16 %v216, %v215
        %v229 = vpack.c.b16 %v218, %v217
        %v230 = vpack.c.b16 %v220, %v219
        %v231 = vpack.c.b16 %v222, %v221
        %v232 = vpack.c.b16 %v224, %v223
        %v237 = vunpack.c.l.b16 %v189
        %v238 = vunpack.c.l.b16 %v190
        %v239 = vunpack.c.l.b16 %v191
        %v240 = vunpack.c.l.b16 %v192
        %v241 = vpack.c.b16 %v238, %v237
        %v242 = vpack.c.b16 %v240, %v239
        %vm245 = vcmask 261120
        %v247 = vsel %vm245, %v225, 0
        %v250 = vsel %vm245, %v226, 0
        %v253 = vsel %vm245, %v227, 0
        %v256 = vsel %vm245, %v228, 0
        %v259 = vsel %vm245, %v229, 0
        %v262 = vsel %vm245, %v230, 0
        %v265 = vsel %vm245, %v231, 0
        %v268 = vsel %vm245, %v232, 0
        %270 = vmatprep.subr.bf16.mxu0 0
        %271 = vmatpush1.bf16.msra.mxu0 %v241
        %272 = vmatprep.subr.bf16.mxu0 0
        %273 = vmatpush1.bf16.msra.mxu0 %v242
        %274 = vmatprep.subr.bf16.mxu0 0
        %275 = vmatpush1.bf16.msra.mxu0 0
        %276 = vmatprep.subr.bf16.mxu0 0
        %277 = vmatpush1.bf16.msra.mxu0 0
        %278 = vmatprep.subr.bf16.mxu0 0
        %279 = vmatpush1.bf16.msra.mxu0 0
        %280 = vmatprep.subr.bf16.mxu0 0
        %281 = vmatpush1.bf16.msra.mxu0 0
        %282 = vmatprep.subr.bf16.mxu0 0
        %283 = vmatpush1.bf16.msra.mxu0 0
        %284 = vmatprep.subr.bf16.mxu0 0
        %285 = vmatpush1.bf16.msra.mxu0 0
        %286 = vmatprep.subr.bf16.mxu0 0
        %287 = vmatpush1.bf16.msra.mxu0 0
        %288 = vmatprep.subr.bf16.mxu0 0
        %289 = vmatpush1.bf16.msra.mxu0 0
        %290 = vmatprep.subr.bf16.mxu0 0
        %291 = vmatpush1.bf16.msra.mxu0 0
        %292 = vmatprep.subr.bf16.mxu0 0
        %293 = vmatpush1.bf16.msra.mxu0 0
        %294 = vmatprep.subr.bf16.mxu0 0
        %295 = vmatpush1.bf16.msra.mxu0 0
        %296 = vmatprep.subr.bf16.mxu0 0
        %297 = vmatpush1.bf16.msra.mxu0 0
        %298 = vmatprep.subr.bf16.mxu0 0
        %299 = vmatpush1.bf16.msra.mxu0 0
        %300 = vmatprep.subr.bf16.mxu0 0
        %301 = vmatpush1.bf16.msra.mxu0 0
        %302 = vmatprep.mubr.bf16.mxu0 0
        %303 = vmatmul.mubr.bf16.gmra.mrb[0].mxu0 %v247
        %v304 = vpop.f32.mrb[0].mxu0
        %v305 = vadd.f32 0.0, %v304
        %v306 = vpop.f32.mrb[0].mxu0
        %v307 = vpop.f32.mrb[0].mxu0
        %v308 = vadd.f32 0.0, %v307
        %v309 = vpop.f32.mrb[0].mxu0
        %310 = vmatprep.mubr.bf16.mxu0 0
        %311 = vmatmul.mubr.bf16.gmra.mrb[0].mxu0 %v250
        %v312 = vpop.f32.mrb[0].mxu0
        %v313 = vadd.f32 0.0, %v312
        %v314 = vpop.f32.mrb[0].mxu0
        %v315 = vpop.f32.mrb[0].mxu0
        %v316 = vadd.f32 0.0, %v315
        %v317 = vpop.f32.mrb[0].mxu0
        %318 = vmatprep.mubr.bf16.mxu0 0
        %319 = vmatmul.mubr.bf16.gmra.mrb[0].mxu0 %v253
        %v320 = vpop.f32.mrb[0].mxu0
        %v321 = vadd.f32 0.0, %v320
        %v322 = vpop.f32.mrb[0].mxu0
        %v323 = vpop.f32.mrb[0].mxu0
        %v324 = vadd.f32 0.0, %v323
        %v325 = vpop.f32.mrb[0].mxu0
        %326 = vmatprep.mubr.bf16.mxu0 0
        %327 = vmatmul.mubr.bf16.gmra.mrb[0].mxu0 %v256
        %v328 = vpop.f32.mrb[0].mxu0
        %v329 = vadd.f32 0.0, %v328
        %v330 = vpop.f32.mrb[0].mxu0
        %v331 = vpop.f32.mrb[0].mxu0
        %v332 = vadd.f32 0.0, %v331
        %v333 = vpop.f32.mrb[0].mxu0
        %334 = vmatprep.mubr.bf16.mxu0 0
        %335 = vmatmul.mubr.bf16.gmra.mrb[0].mxu0 %v259
        %v336 = vpop.f32.mrb[0].mxu0
        %v337 = vadd.f32 0.0, %v336
        %v338 = vpop.f32.mrb[0].mxu0
        %v339 = vpop.f32.mrb[0].mxu0
        %v340 = vadd.f32 0.0, %v339
        %v341 = vpop.f32.mrb[0].mxu0
        %342 = vmatprep.mubr.bf16.mxu0 0
        %343 = vmatmul.mubr.bf16.gmra.mrb[0].mxu0 %v262
        %v344 = vpop.f32.mrb[0].mxu0
        %v345 = vadd.f32 0.0, %v344
        %v346 = vpop.f32.mrb[0].mxu0
        %v347 = vpop.f32.mrb[0].mxu0
        %v348 = vadd.f32 0.0, %v347
        %v349 = vpop.f32.mrb[0].mxu0
        %350 = vmatprep.mubr.bf16.mxu0 0
        %351 = vmatmul.mubr.bf16.gmra.mrb[0].mxu0 %v265
        %v352 = vpop.f32.mrb[0].mxu0
        %v353 = vadd.f32 0.0, %v352
        %v354 = vpop.f32.mrb[0].mxu0
        %v355 = vpop.f32.mrb[0].mxu0
        %v356 = vadd.f32 0.0, %v355
        %v357 = vpop.f32.mrb[0].mxu0
        %358 = vmatprep.mubr.bf16.mxu0 0
        %359 = vmatmul.mubr.bf16.gmra.mrb[0].mxu0 %v268
        %v360 = vpop.f32.mrb[0].mxu0
        %v361 = vadd.f32 0.0, %v360
        %v362 = vpop.f32.mrb[0].mxu0
        %v363 = vpop.f32.mrb[0].mxu0
        %v364 = vadd.f32 0.0, %v363
        %v365 = vpop.f32.mrb[0].mxu0
        %366 = vdwg.mxu0
        %v367 = vld [vmem:[%s169] sm:$0xf]
        %v368 = vld [vmem:[%s169 + $0x4] sm:$0xf]
        %v369 = vld [vmem:[%s169 + $0x8] sm:$0xf]
        %v370 = vld [vmem:[%s169 + $0xc] sm:$0xf]
        %v371 = vld [vmem:[%s169 + $0x10] sm:$0xf]
        %v372 = vld [vmem:[%s169 + $0x14] sm:$0xf]
        %v373 = vld [vmem:[%s169 + $0x18] sm:$0xf]
        %v374 = vld [vmem:[%s169 + $0x1c] sm:$0xf]
        %v375 = vpack.c.bf16 %v308, %v305
        %v376 = vpack.c.bf16 %v316, %v313
        %v377 = vpack.c.bf16 %v324, %v321
        %v378 = vpack.c.bf16 %v332, %v329
        %v379 = vpack.c.bf16 %v340, %v337
        %v380 = vpack.c.bf16 %v348, %v345
        %v381 = vpack.c.bf16 %v356, %v353
        %v382 = vpack.c.bf16 %v364, %v361
        %v391 = vunpack.c.l.b16 %v367
        %v392 = vunpack.c.l.b16 %v368
        %v393 = vunpack.c.l.b16 %v369
        %v394 = vunpack.c.l.b16 %v370
        %v395 = vunpack.c.l.b16 %v371
        %v396 = vunpack.c.l.b16 %v372
        %v397 = vunpack.c.l.b16 %v373
        %v398 = vunpack.c.l.b16 %v374
        %v399 = vpack.c.b16 %v392, %v391
        %v400 = vpack.c.b16 %v394, %v393
        %v401 = vpack.c.b16 %v396, %v395
        %v402 = vpack.c.b16 %v398, %v397
        %407 = vmatprep.subr.bf16.mxu0 0
        %408 = vmatpush1.bf16.msra.mxu0 %v375
        %409 = vmatprep.subr.bf16.mxu0 0
        %410 = vmatpush1.bf16.msra.mxu0 %v376
        %411 = vmatprep.subr.bf16.mxu0 0
        %412 = vmatpush1.bf16.msra.mxu0 %v377
        %413 = vmatprep.subr.bf16.mxu0 0
        %414 = vmatpush1.bf16.msra.mxu0 %v378
        %415 = vmatprep.subr.bf16.mxu0 0
        %416 = vmatpush1.bf16.msra.mxu0 %v379
        %417 = vmatprep.subr.bf16.mxu0 0
        %418 = vmatpush1.bf16.msra.mxu0 %v380
        %419 = vmatprep.subr.bf16.mxu0 0
        %420 = vmatpush1.bf16.msra.mxu0 %v381
        %421 = vmatprep.subr.bf16.mxu0 0
        %422 = vmatpush1.bf16.msra.mxu0 %v382
        %423 = vmatprep.subr.bf16.mxu0 0
        %424 = vmatpush1.bf16.msra.mxu0 0
        %425 = vmatprep.subr.bf16.mxu0 0
        %426 = vmatpush1.bf16.msra.mxu0 0
        %427 = vmatprep.subr.bf16.mxu0 0
        %428 = vmatpush1.bf16.msra.mxu0 0
        %429 = vmatprep.subr.bf16.mxu0 0
        %430 = vmatpush1.bf16.msra.mxu0 0
        %431 = vmatprep.subr.bf16.mxu0 0
        %432 = vmatpush1.bf16.msra.mxu0 0
        %433 = vmatprep.subr.bf16.mxu0 0
        %434 = vmatpush1.bf16.msra.mxu0 0
        %435 = vmatprep.subr.bf16.mxu0 0
        %436 = vmatpush1.bf16.msra.mxu0 0
        %437 = vmatprep.subr.bf16.mxu0 0
        %438 = vmatpush1.bf16.msra.mxu0 0
        %439 = vmatprep.mubr.bf16.mxu0 0
        %440 = vmatmul.mubr.bf16.gmra.mrb[0].mxu0 %v399
        %v441 = vpop.f32.mrb[0].mxu0
        %v442 = vadd.f32 0.0, %v441
        %v443 = vpop.f32.mrb[0].mxu0
        %v444 = vpop.f32.mrb[0].mxu0
        %v445 = vadd.f32 0.0, %v444
        %v446 = vpop.f32.mrb[0].mxu0
        %447 = vmatprep.mubr.bf16.mxu0 0
        %448 = vmatmul.mubr.bf16.gmra.mrb[0].mxu0 %v400
        %v449 = vpop.f32.mrb[0].mxu0
        %v450 = vadd.f32 0.0, %v449
        %v451 = vpop.f32.mrb[0].mxu0
        %v452 = vpop.f32.mrb[0].mxu0
        %v453 = vadd.f32 0.0, %v452
        %v454 = vpop.f32.mrb[0].mxu0
        %455 = vmatprep.mubr.bf16.mxu0 0
        %456 = vmatmul.mubr.bf16.gmra.mrb[0].mxu0 %v401
        %v457 = vpop.f32.mrb[0].mxu0
        %v458 = vadd.f32 0.0, %v457
        %v459 = vpop.f32.mrb[0].mxu0
        %v460 = vpop.f32.mrb[0].mxu0
        %v461 = vadd.f32 0.0, %v460
        %v462 = vpop.f32.mrb[0].mxu0
        %463 = vmatprep.mubr.bf16.mxu0 0
        %464 = vmatmul.mubr.bf16.gmra.mrb[0].mxu0 %v402
        %v465 = vpop.f32.mrb[0].mxu0
        %v466 = vadd.f32 0.0, %v465
        %v467 = vpop.f32.mrb[0].mxu0
        %v468 = vpop.f32.mrb[0].mxu0
        %v469 = vadd.f32 0.0, %v468
        %v470 = vpop.f32.mrb[0].mxu0
        %471 = vdwg.mxu0
        %472 = vst [vmem:[%s164] sm:$0xff] %v442
        %473 = vst [vmem:[%s164 + $0x8] sm:$0xff] %v445
        %474 = vst [vmem:[%s164 + $0x10] sm:$0xff] %v450
        %475 = vst [vmem:[%s164 + $0x18] sm:$0xff] %v453
        %476 = vst [vmem:[%s164 + $0x20] sm:$0xff] %v458
        %477 = vst [vmem:[%s164 + $0x28] sm:$0xff] %v461
        %478 = vst [vmem:[%s164 + $0x30] sm:$0xff] %v466
        %479 = vst [vmem:[%s164 + $0x38] sm:$0xff] %v469
        %s480 = sand.u32 %s93, 1
        %s481 = scalar_lea.sflag [#allocation3], %s480
        %s482 = sand.u32 %s93, 1
        %s483 = smul.addr %s482, 64
        %s484 = scalar_lea.vmem [#allocation2], %s483
        // Predicated region
        $region33: #{tpu_custom_call.1} parent=31 // pred_check
          %p485 = pneg %p103
        $region34: #{tpu_custom_call.1} parent=31 // pred_check_branch
          %487 = sbr.rel (%p485) target = $region36
        $region35: #{tpu_custom_call.1} parent=31 // pred_region
          %s488 = smul.u32 8, %s17
          %s490 = ssub.s32 1024, 1024
          %491 = vsyncadd %s481, %s490
          %s492 = smul.addr %s488, 128
          %s493 = scalar_lea.hbm %s3, %s492
          %s494 = sshll.u32 %s484, 4
          %s495 = int_to_ptr.vmem [resolvable:$true] %s494
          %500 = dma.vmem_to_hbm [thread:$0]  %s495, 1024, %s493, %s481, 128, 128, 8
        $region36: #{tpu_custom_call.1} parent=31 // pred_fallthru
          _
      $region32: #{tpu_custom_call.1} parent=5 // pred_fallthru
        _
      %p501 = scmp.le.s32.totalorder 2, %s12
      // Predicated region
      $region37: #{tpu_custom_call.1} parent=5 // pred_check
        %p502 = pneg %p501
      $region38: #{tpu_custom_call.1} parent=5 // pred_check_branch
        %504 = sbr.rel (%p502) target = $region40
      $region39: #{tpu_custom_call.1} parent=5 // pred_region
        %s505 = ssub.s32 %s12, 2
        // Predicated region
        $region41: #{tpu_custom_call.1} parent=39 // pred_check
          %p506 = pneg %p109
        $region42: #{tpu_custom_call.1} parent=39 // pred_check_branch
          %508 = sbr.rel (%p506) target = $region44
        $region43: #{tpu_custom_call.1} parent=39 // pred_region
          %s509 = sand.u32 %s94, 1
          %s510 = scalar_lea.sflag [#allocation3], %s509
          %s511 = sand.u32 %s94, 1
          %s512 = smul.addr %s511, 64
          %s513 = scalar_lea.vmem [#allocation2], %s512
          %514 = dma.done %s510, 1024
        $region44: #{tpu_custom_call.1} parent=39 // pred_fallthru
          _
      $region40: #{tpu_custom_call.1} parent=5 // pred_fallthru
        _
    $region6: #{tpu_custom_call.1} parent=1 // loop_footer
      %s16 = sadd.s32 1, %s12
    $region7: #{tpu_custom_call.1} parent=1 // loop_footer_branch
      %11 = sbr.rel target = $region3
    $region8: #{tpu_custom_call.1} parent=1 // loop_exit
      _
    %515 = vsyncpa [#allocation3], 1
    %s516 = scalar_lea.sflag [#allocation3], 1
    %517 = vsyncpa %s516, 1

</llo_original>
